<compile_context>
chip_gen: v5e
topology: v5e:2x2
jax: 0.10.0
libtpu: 0.0.40
codegen_flags: <defaults>
</compile_context>

<pallas_src>
import functools

import jax
import jax.numpy as jnp
from jax import lax
from jax.experimental import pallas as pl
from jax.experimental.pallas import tpu as pltpu


def _round_up(x, m):
    return (x + m - 1) // m * m


def _gru_recurrence_kernel(tmax_ref, lens_ref, gi_ref, whh_ref, bh_ref,
                           h_ref, *, hidden, t_chunk):
    """One (batch-tile, time-chunk) grid cell of the GRU recurrence.

    tmax_ref : (num_btiles,) int32 SMEM  per-batch-tile max sequence length
    lens_ref : (TB, 1)       int32 VMEM  per-row sequence lengths (resident)
    gi_ref   : (T_CHUNK, TB, G3p) f32    precomputed x@W_ih^T + b_ih slab
    whh_ref  : (H, G3p)      f32         fused hidden weights (resident)
    bh_ref   : (1, G3p)      f32         fused hidden bias b_hh (resident)
    h_ref    : (TB, H)       f32         hidden state, resident across chunks
    """
    b = pl.program_id(0)
    c = pl.program_id(1)

    @pl.when(c == 0)
    def _init():
        h_ref[...] = jnp.zeros_like(h_ref)

    tile_max = tmax_ref[b]

    # Skip whole chunks that lie entirely in the padded tail of this tile.
    @pl.when(c * t_chunk < tile_max)
    def _run():
        lens_v = lens_ref[...]                          # (TB, 1) int32
        b_h = bh_ref[...]                               # (1, G3p) f32
        h0 = h_ref[...].astype(jnp.float32)             # (TB, H)  f32

        def step(t, h):
            gi_t = gi_ref[t]                            # (TB, G3p) f32
            # Single fused dot per timestep on the serial path.
            gh = jnp.dot(h, whh_ref[...],
                         preferred_element_type=jnp.float32) + b_h
            # r and z: one fused sigmoid over a lane-dense (TB, 2H) slab.
            rz = jax.nn.sigmoid(gi_t[:, :2 * hidden] + gh[:, :2 * hidden])
            r = rz[:, :hidden]
            z = rz[:, hidden:2 * hidden]
            n = jnp.tanh(gi_t[:, 2 * hidden:3 * hidden]
                         + r * gh[:, 2 * hidden:3 * hidden])
            h_new = (1.0 - z) * n + z * h
            # pack_padded_sequence: freeze rows whose length is exhausted.
            keep = (c * t_chunk + t) < lens_v           # (TB, 1) bool
            return jnp.where(keep, h_new, h)

        h_final = lax.fori_loop(0, t_chunk, step, h0, unroll=True)
        h_ref[...] = h_final.astype(h_ref.dtype)


def gru_mwe_forward(batch_mwe, mwe_lengths,
                    weight_ih, weight_hh, bias_ih, bias_hh,
                    *, t_chunk=16, max_tb=128):
    """Pallas implementation of GRUMweModel.forward (1 layer, unidirectional).

    batch_mwe  : (B, S, D) float   word embeddings per MWE (batch_first)
    mwe_lengths: (B,)      int     number of valid words per MWE
    weight_ih  : (3H, D)   float   PyTorch layout [W_ir | W_iz | W_in]
    weight_hh  : (3H, H)   float   PyTorch layout [W_hr | W_hz | W_hn]
    bias_ih    : (3H,)     float
    bias_hh    : (3H,)     float
    returns    : (B, H)    last hidden state per sequence
    """
    B, S, D = batch_mwe.shape
    H = weight_hh.shape[1]
    assert weight_ih.shape == (3 * H, D)
    assert weight_hh.shape == (3 * H, H)

    f32 = jnp.float32
    G3 = 3 * H
    G3p = _round_up(G3, 128)          # lane-dense gate axis

    x = batch_mwe.astype(f32)
    lens = jnp.asarray(mwe_lengths, jnp.int32)

    # ---- Hoisted input projection: one large MXU-friendly matmul ----------
    # Time-major so the kernel streams lane-dense (T_CHUNK, TB, 3Hp) slabs.
    x_tm = jnp.transpose(x, (1, 0, 2))                          # (S, B, D)
    gi = jnp.dot(x_tm.reshape(S * B, D), weight_ih.astype(f32).T)
    gi = (gi + bias_ih.astype(f32)).reshape(S, B, G3)

    # ---- Tiling / padding --------------------------------------------------
    TB = min(max_tb, _round_up(B, 8))          # batch tile (sublane-aligned)
    B_pad = _round_up(B, TB)
    TC = min(t_chunk, S)                       # timesteps per grid step
    S_pad = _round_up(S, TC)

    gi = jnp.pad(gi, ((0, S_pad - S), (0, B_pad - B), (0, G3p - G3)))
    lens_pad = jnp.pad(lens, (0, B_pad - B))   # padded rows have length 0
    lens2d = lens_pad.reshape(B_pad, 1)

    num_btiles = B_pad // TB
    tile_max = jnp.max(lens_pad.reshape(num_btiles, TB), axis=1)
    tile_max = tile_max.astype(jnp.int32)      # scalar-prefetched to SMEM

    # Fused, pre-transposed hidden weights / bias (resident in VMEM).
    whh_f = jnp.pad(weight_hh.astype(f32).T, ((0, 0), (0, G3p - G3)))  # (H,G3p)
    bh_f = jnp.pad(bias_hh.astype(f32), (0, G3p - G3)).reshape(1, G3p)

    grid = (num_btiles, S_pad // TC)

    kernel = functools.partial(_gru_recurrence_kernel, hidden=H, t_chunk=TC)

    cost = pl.CostEstimate(
        flops=2 * B_pad * S_pad * H * G3p,
        transcendentals=3 * B_pad * S_pad * H,
        bytes_accessed=4 * (S_pad * B_pad * G3p + H * G3p + G3p
                            + B_pad * (H + 1)),
    )

    out = pl.pallas_call(
        kernel,
        out_shape=jax.ShapeDtypeStruct((B_pad, H), f32),
        grid_spec=pltpu.PrefetchScalarGridSpec(
            num_scalar_prefetch=1,          # tile_max -> SMEM
            grid=grid,
            in_specs=[
                # per-row lengths: resident per batch tile
                pl.BlockSpec((TB, 1), lambda b, c, tm: (b, 0)),
                # GI: one (T_CHUNK, TB, 3Hp) slab per grid step
                pl.BlockSpec((TC, TB, G3p), lambda b, c, tm: (c, b, 0)),
                # fused hidden weights / bias: constant index_map -> resident
                # (for very large H, pipeline_mode=pl.Buffered(1) would halve
                #  their VMEM footprint on v7x's 64 MiB budget)
                pl.BlockSpec((H, G3p), lambda b, c, tm: (0, 0)),
                pl.BlockSpec((1, G3p), lambda b, c, tm: (0, 0)),
            ],
            # hidden state lives in the resident output block (accumulator)
            out_specs=pl.BlockSpec((TB, H), lambda b, c, tm: (b, 0)),
        ),
        compiler_params=pltpu.CompilerParams(
            dimension_semantics=("parallel", "arbitrary")),
        cost_estimate=cost,
    )(tile_max, lens2d, gi, whh_f, bh_f)

    return out[:B].astype(batch_mwe.dtype)


def _reference_gru(batch_mwe, lengths, weight_ih, weight_hh, bias_ih, bias_hh):
    """Pure-JAX reference: masked GRU scan == packed-sequence last hidden."""
    B, S, _ = batch_mwe.shape
    H = weight_hh.shape[1]
    w_ir, w_iz, w_in = jnp.split(weight_ih, 3, axis=0)
    w_hr, w_hz, w_hn = jnp.split(weight_hh, 3, axis=0)
    b_ir, b_iz, b_in = jnp.split(bias_ih, 3)
    b_hr, b_hz, b_hn = jnp.split(bias_hh, 3)
    h = jnp.zeros((B, H), jnp.float32)
    for t in range(S):
        x_t = batch_mwe[:, t, :]
        r = jax.nn.sigmoid(x_t @ w_ir.T + b_ir + h @ w_hr.T + b_hr)
        z = jax.nn.sigmoid(x_t @ w_iz.T + b_iz + h @ w_hz.T + b_hz)
        n = jnp.tanh(x_t @ w_in.T + b_in + r * (h @ w_hn.T + b_hn))
        h_new = (1.0 - z) * n + z * h
        mask = (t < lengths)[:, None]
        h = jnp.where(mask, h_new, h)
    return h


if __name__ == "__main__":
    key = jax.random.PRNGKey(0)

    # ---------- Case 1: module-faithful small config -----------------------
    # params = {'embedding_dim': 32, 'num_layers': 1, 'bidirectional': False}
    B, S, D = 2, 8, 32
    H = D
    k_x, k_ih, k_hh, k2 = jax.random.split(key, 4)

    batch_mwe = jax.random.normal(k_x, (B, S, D), dtype=jnp.float32)
    mwe_lengths = jnp.array([S, 5], dtype=jnp.int32)   # sorted descending

    std_ih = (2.0 / (D + 3 * H)) ** 0.5                # xavier_normal_
    std_hh = (2.0 / (H + 3 * H)) ** 0.5
    weight_ih = std_ih * jax.random.normal(k_ih, (3 * H, D), dtype=jnp.float32)
    weight_hh = std_hh * jax.random.normal(k_hh, (3 * H, H), dtype=jnp.float32)
    bias_ih = jnp.zeros((3 * H,), dtype=jnp.float32)   # constant_(0)
    bias_hh = jnp.zeros((3 * H,), dtype=jnp.float32)

    out = gru_mwe_forward(batch_mwe, mwe_lengths,
                          weight_ih, weight_hh, bias_ih, bias_hh)
    out = jax.block_until_ready(out)
    ref = _reference_gru(batch_mwe, mwe_lengths,
                         weight_ih, weight_hh, bias_ih, bias_hh)
    assert out.shape == (B, H)
    assert jnp.allclose(out, ref, atol=1e-4, rtol=1e-4), "case1 mismatch"

    # ---------- Case 2: exercises batch/time padding, chunking, chunk skip --
    B2, S2 = 20, 21
    k_x2, k_ih2, k_hh2, k_bi, k_bh, k_len = jax.random.split(k2, 6)
    x2 = jax.random.normal(k_x2, (B2, S2, D), dtype=jnp.float32)
    lens2 = jnp.sort(jax.random.randint(k_len, (B2,), 1, S2 + 1))[::-1]
    lens2 = lens2.astype(jnp.int32)
    w_ih2 = std_ih * jax.random.normal(k_ih2, (3 * H, D), dtype=jnp.float32)
    w_hh2 = std_hh * jax.random.normal(k_hh2, (3 * H, H), dtype=jnp.float32)
    b_ih2 = 0.1 * jax.random.normal(k_bi, (3 * H,), dtype=jnp.float32)
    b_hh2 = 0.1 * jax.random.normal(k_bh, (3 * H,), dtype=jnp.float32)

    out2 = gru_mwe_forward(x2, lens2, w_ih2, w_hh2, b_ih2, b_hh2)
    out2 = jax.block_until_ready(out2)
    ref2 = _reference_gru(x2, lens2, w_ih2, w_hh2, b_ih2, b_hh2)
    assert out2.shape == (B2, H)
    assert jnp.allclose(out2, ref2, atol=1e-4, rtol=1e-4), "case2 mismatch"

    print("KERNEL_OK")
</pallas_src>

<mosaic_0001>
module attributes {stable_mosaic.version = 11 : i64} {
  func.func @_gru_recurrence_kernel(%arg0: i32, %arg1: i32, %arg2: memref<1xi32, #tpu.memory_space<smem>>, %arg3: memref<8x1xi32, #tpu.memory_space<vmem>>, %arg4: memref<8x8x128xf32, #tpu.memory_space<vmem>>, %arg5: memref<32x128xf32, #tpu.memory_space<vmem>>, %arg6: memref<1x128xf32, #tpu.memory_space<vmem>>, %arg7: memref<8x32xf32, #tpu.memory_space<vmem>>) attributes {dimension_semantics = [#tpu.dimension_semantics<parallel>, #tpu.dimension_semantics<arbitrary>], iteration_bounds = array<i64: 1, 1>, scalar_prefetch = 1 : i64, scratch_operands = 0 : i64, tpu.core_type = #tpu.core_type<tc>, window_params = [{transform_indices = @transform_0, window_bounds = array<i64: 8, 1>}, {transform_indices = @transform_1, window_bounds = array<i64: 8, 8, 128>}, {pipeline_mode = #tpu.pipeline_mode<synchronous>, transform_indices = @transform_2, window_bounds = array<i64: 32, 128>}, {pipeline_mode = #tpu.pipeline_mode<synchronous>, transform_indices = @transform_3, window_bounds = array<i64: 1, 128>}, {transform_indices = @transform_4, window_bounds = array<i64: 8, 32>}]} {
    %c0_i32 = arith.constant 0 : i32
    %0 = arith.cmpi eq, %arg1, %c0_i32 : i32
    %1 = arith.extui %0 : i1 to i32
    %c0_i32_0 = arith.constant 0 : i32
    %2 = arith.cmpi ne, %1, %c0_i32_0 : i32
    scf.if %2 {
      %cst = arith.constant 0.000000e+00 : f32
      %9 = vector.broadcast %cst : f32 to vector<8x32xf32>
      %c0 = arith.constant 0 : index
      %c0_2 = arith.constant 0 : index
      %10 = vector.load %arg7[%c0, %c0_2] : memref<8x32xf32, #tpu.memory_space<vmem>>, vector<8x32xf32>
      tpu.vector_store %arg7[%c0, %c0_2], %9 {strides = array<i32>} : memref<8x32xf32, #tpu.memory_space<vmem>>, vector<8x32xf32>,
    } else {
    }
    %3 = arith.index_cast %arg0 : i32 to index
    %4 = memref.load %arg2[%3] : memref<1xi32, #tpu.memory_space<smem>>
    %c8_i32 = arith.constant 8 : i32
    %5 = arith.muli %arg1, %c8_i32 : i32
    %6 = arith.cmpi slt, %5, %4 : i32
    %7 = arith.extui %6 : i1 to i32
    %c0_i32_1 = arith.constant 0 : i32
    %8 = arith.cmpi ne, %7, %c0_i32_1 : i32
    scf.if %8 {
      %c0 = arith.constant 0 : index
      %c0_2 = arith.constant 0 : index
      %9 = vector.load %arg3[%c0, %c0_2] : memref<8x1xi32, #tpu.memory_space<vmem>>, vector<8x1xi32>
      %c0_3 = arith.constant 0 : index
      %c0_4 = arith.constant 0 : index
      %10 = vector.load %arg6[%c0_3, %c0_4] : memref<1x128xf32, #tpu.memory_space<vmem>>, vector<1x128xf32>
      %c0_5 = arith.constant 0 : index
      %c0_6 = arith.constant 0 : index
      %11 = vector.load %arg7[%c0_5, %c0_6] : memref<8x32xf32, #tpu.memory_space<vmem>>, vector<8x32xf32>
      %c0_i32_7 = arith.constant 0 : i32
      %12 = arith.index_cast %c0_i32_7 : i32 to index
      %c0_8 = arith.constant 0 : index
      %c0_9 = arith.constant 0 : index
      %13 = vector.load %arg4[%12, %c0_8, %c0_9] : memref<8x8x128xf32, #tpu.memory_space<vmem>>, vector<1x8x128xf32>
      %14 = vector.shape_cast %13 : vector<1x8x128xf32> to vector<8x128xf32>
      %c0_10 = arith.constant 0 : index
      %c0_11 = arith.constant 0 : index
      %15 = vector.load %arg5[%c0_10, %c0_11] : memref<32x128xf32, #tpu.memory_space<vmem>>, vector<32x128xf32>
      %cst = arith.constant dense<0.000000e+00> : vector<8x128xf32>
      %16 = tpu.matmul %11, %15, %cst {dimension_numbers = #tpu.dot_dimension_numbers<[1], [0], [0], [1], [0, 0, 1, 1], [], []>} : vector<8x32xf32>, vector<32x128xf32>, vector<8x128xf32> -> vector<8x128xf32>
      %17 = vector.broadcast %10 : vector<1x128xf32> to vector<8x128xf32>
      %18 = arith.addf %16, %17 : vector<8x128xf32>
      %19 = vector.extract_strided_slice %14 {offsets = [0, 0], sizes = [8, 64], strides = [1, 1]} : vector<8x128xf32> to vector<8x64xf32>
      %20 = vector.extract_strided_slice %18 {offsets = [0, 0], sizes = [8, 64], strides = [1, 1]} : vector<8x128xf32> to vector<8x64xf32>
      %21 = arith.addf %19, %20 : vector<8x64xf32>
      %22 = arith.negf %21 : vector<8x64xf32>
      %23 = math.exp %22 : vector<8x64xf32>
      %cst_12 = arith.constant 1.000000e+00 : f32
      %24 = vector.broadcast %cst_12 : f32 to vector<8x64xf32>
      %25 = arith.addf %24, %23 : vector<8x64xf32>
      %26 = arith.divf %24, %25 : vector<8x64xf32>
      %27 = vector.extract_strided_slice %26 {offsets = [0, 0], sizes = [8, 32], strides = [1, 1]} : vector<8x64xf32> to vector<8x32xf32>
      %28 = vector.extract_strided_slice %26 {offsets = [0, 32], sizes = [8, 32], strides = [1, 1]} : vector<8x64xf32> to vector<8x32xf32>
      %29 = vector.extract_strided_slice %14 {offsets = [0, 64], sizes = [8, 32], strides = [1, 1]} : vector<8x128xf32> to vector<8x32xf32>
      %30 = vector.extract_strided_slice %18 {offsets = [0, 64], sizes = [8, 32], strides = [1, 1]} : vector<8x128xf32> to vector<8x32xf32>
      %31 = arith.mulf %27, %30 : vector<8x32xf32>
      %32 = arith.addf %29, %31 : vector<8x32xf32>
      %33 = math.tanh %32 : vector<8x32xf32>
      %cst_13 = arith.constant 1.000000e+00 : f32
      %34 = vector.broadcast %cst_13 : f32 to vector<8x32xf32>
      %35 = arith.subf %34, %28 : vector<8x32xf32>
      %36 = arith.mulf %35, %33 : vector<8x32xf32>
      %37 = arith.mulf %28, %11 : vector<8x32xf32>
      %38 = arith.addf %36, %37 : vector<8x32xf32>
      %c8_i32_14 = arith.constant 8 : i32
      %39 = arith.muli %arg1, %c8_i32_14 : i32
      %40 = arith.addi %39, %c0_i32_7 : i32
      %41 = vector.broadcast %40 : i32 to vector<8x1xi32>
      %42 = arith.cmpi slt, %41, %9 : vector<8x1xi32>
      %43 = vector.shape_cast %42 : vector<8x1xi1> to vector<8x1xi1>
      %44 = vector.broadcast %43 : vector<8x1xi1> to vector<8x32xi1>
      %45 = arith.select %44, %38, %11 : vector<8x32xi1>, vector<8x32xf32>
      %c1_i32 = arith.constant 1 : i32
      %46 = arith.index_cast %c1_i32 : i32 to index
      %c0_15 = arith.constant 0 : index
      %c0_16 = arith.constant 0 : index
      %47 = vector.load %arg4[%46, %c0_15, %c0_16] : memref<8x8x128xf32, #tpu.memory_space<vmem>>, vector<1x8x128xf32>
      %48 = vector.shape_cast %47 : vector<1x8x128xf32> to vector<8x128xf32>
      %c0_17 = arith.constant 0 : index
      %c0_18 = arith.constant 0 : index
      %49 = vector.load %arg5[%c0_17, %c0_18] : memref<32x128xf32, #tpu.memory_space<vmem>>, vector<32x128xf32>
      %cst_19 = arith.constant dense<0.000000e+00> : vector<8x128xf32>
      %50 = tpu.matmul %45, %49, %cst_19 {dimension_numbers = #tpu.dot_dimension_numbers<[1], [0], [0], [1], [0, 0, 1, 1], [], []>} : vector<8x32xf32>, vector<32x128xf32>, vector<8x128xf32> -> vector<8x128xf32>
      %51 = vector.broadcast %10 : vector<1x128xf32> to vector<8x128xf32>
      %52 = arith.addf %50, %51 : vector<8x128xf32>
      %53 = vector.extract_strided_slice %48 {offsets = [0, 0], sizes = [8, 64], strides = [1, 1]} : vector<8x128xf32> to vector<8x64xf32>
      %54 = vector.extract_strided_slice %52 {offsets = [0, 0], sizes = [8, 64], strides = [1, 1]} : vector<8x128xf32> to vector<8x64xf32>
      %55 = arith.addf %53, %54 : vector<8x64xf32>
      %56 = arith.negf %55 : vector<8x64xf32>
      %57 = math.exp %56 : vector<8x64xf32>
      %cst_20 = arith.constant 1.000000e+00 : f32
      %58 = vector.broadcast %cst_20 : f32 to vector<8x64xf32>
      %59 = arith.addf %58, %57 : vector<8x64xf32>
      %60 = arith.divf %58, %59 : vector<8x64xf32>
      %61 = vector.extract_strided_slice %60 {offsets = [0, 0], sizes = [8, 32], strides = [1, 1]} : vector<8x64xf32> to vector<8x32xf32>
      %62 = vector.extract_strided_slice %60 {offsets = [0, 32], sizes = [8, 32], strides = [1, 1]} : vector<8x64xf32> to vector<8x32xf32>
      %63 = vector.extract_strided_slice %48 {offsets = [0, 64], sizes = [8, 32], strides = [1, 1]} : vector<8x128xf32> to vector<8x32xf32>
      %64 = vector.extract_strided_slice %52 {offsets = [0, 64], sizes = [8, 32], strides = [1, 1]} : vector<8x128xf32> to vector<8x32xf32>
      %65 = arith.mulf %61, %64 : vector<8x32xf32>
      %66 = arith.addf %63, %65 : vector<8x32xf32>
      %67 = math.tanh %66 : vector<8x32xf32>
      %cst_21 = arith.constant 1.000000e+00 : f32
      %68 = vector.broadcast %cst_21 : f32 to vector<8x32xf32>
      %69 = arith.subf %68, %62 : vector<8x32xf32>
      %70 = arith.mulf %69, %67 : vector<8x32xf32>
      %71 = arith.mulf %62, %45 : vector<8x32xf32>
      %72 = arith.addf %70, %71 : vector<8x32xf32>
      %c8_i32_22 = arith.constant 8 : i32
      %73 = arith.muli %arg1, %c8_i32_22 : i32
      %74 = arith.addi %73, %c1_i32 : i32
      %75 = vector.broadcast %74 : i32 to vector<8x1xi32>
      %76 = arith.cmpi slt, %75, %9 : vector<8x1xi32>
      %77 = vector.shape_cast %76 : vector<8x1xi1> to vector<8x1xi1>
      %78 = vector.broadcast %77 : vector<8x1xi1> to vector<8x32xi1>
      %79 = arith.select %78, %72, %45 : vector<8x32xi1>, vector<8x32xf32>
      %c2_i32 = arith.constant 2 : i32
      %80 = arith.index_cast %c2_i32 : i32 to index
      %c0_23 = arith.constant 0 : index
      %c0_24 = arith.constant 0 : index
      %81 = vector.load %arg4[%80, %c0_23, %c0_24] : memref<8x8x128xf32, #tpu.memory_space<vmem>>, vector<1x8x128xf32>
      %82 = vector.shape_cast %81 : vector<1x8x128xf32> to vector<8x128xf32>
      %c0_25 = arith.constant 0 : index
      %c0_26 = arith.constant 0 : index
      %83 = vector.load %arg5[%c0_25, %c0_26] : memref<32x128xf32, #tpu.memory_space<vmem>>, vector<32x128xf32>
      %cst_27 = arith.constant dense<0.000000e+00> : vector<8x128xf32>
      %84 = tpu.matmul %79, %83, %cst_27 {dimension_numbers = #tpu.dot_dimension_numbers<[1], [0], [0], [1], [0, 0, 1, 1], [], []>} : vector<8x32xf32>, vector<32x128xf32>, vector<8x128xf32> -> vector<8x128xf32>
      %85 = vector.broadcast %10 : vector<1x128xf32> to vector<8x128xf32>
      %86 = arith.addf %84, %85 : vector<8x128xf32>
      %87 = vector.extract_strided_slice %82 {offsets = [0, 0], sizes = [8, 64], strides = [1, 1]} : vector<8x128xf32> to vector<8x64xf32>
      %88 = vector.extract_strided_slice %86 {offsets = [0, 0], sizes = [8, 64], strides = [1, 1]} : vector<8x128xf32> to vector<8x64xf32>
      %89 = arith.addf %87, %88 : vector<8x64xf32>
      %90 = arith.negf %89 : vector<8x64xf32>
      %91 = math.exp %90 : vector<8x64xf32>
      %cst_28 = arith.constant 1.000000e+00 : f32
      %92 = vector.broadcast %cst_28 : f32 to vector<8x64xf32>
      %93 = arith.addf %92, %91 : vector<8x64xf32>
      %94 = arith.divf %92, %93 : vector<8x64xf32>
      %95 = vector.extract_strided_slice %94 {offsets = [0, 0], sizes = [8, 32], strides = [1, 1]} : vector<8x64xf32> to vector<8x32xf32>
      %96 = vector.extract_strided_slice %94 {offsets = [0, 32], sizes = [8, 32], strides = [1, 1]} : vector<8x64xf32> to vector<8x32xf32>
      %97 = vector.extract_strided_slice %82 {offsets = [0, 64], sizes = [8, 32], strides = [1, 1]} : vector<8x128xf32> to vector<8x32xf32>
      %98 = vector.extract_strided_slice %86 {offsets = [0, 64], sizes = [8, 32], strides = [1, 1]} : vector<8x128xf32> to vector<8x32xf32>
      %99 = arith.mulf %95, %98 : vector<8x32xf32>
      %100 = arith.addf %97, %99 : vector<8x32xf32>
      %101 = math.tanh %100 : vector<8x32xf32>
      %cst_29 = arith.constant 1.000000e+00 : f32
      %102 = vector.broadcast %cst_29 : f32 to vector<8x32xf32>
      %103 = arith.subf %102, %96 : vector<8x32xf32>
      %104 = arith.mulf %103, %101 : vector<8x32xf32>
      %105 = arith.mulf %96, %79 : vector<8x32xf32>
      %106 = arith.addf %104, %105 : vector<8x32xf32>
      %c8_i32_30 = arith.constant 8 : i32
      %107 = arith.muli %arg1, %c8_i32_30 : i32
      %108 = arith.addi %107, %c2_i32 : i32
      %109 = vector.broadcast %108 : i32 to vector<8x1xi32>
      %110 = arith.cmpi slt, %109, %9 : vector<8x1xi32>
      %111 = vector.shape_cast %110 : vector<8x1xi1> to vector<8x1xi1>
      %112 = vector.broadcast %111 : vector<8x1xi1> to vector<8x32xi1>
      %113 = arith.select %112, %106, %79 : vector<8x32xi1>, vector<8x32xf32>
      %c3_i32 = arith.constant 3 : i32
      %114 = arith.index_cast %c3_i32 : i32 to index
      %c0_31 = arith.constant 0 : index
      %c0_32 = arith.constant 0 : index
      %115 = vector.load %arg4[%114, %c0_31, %c0_32] : memref<8x8x128xf32, #tpu.memory_space<vmem>>, vector<1x8x128xf32>
      %116 = vector.shape_cast %115 : vector<1x8x128xf32> to vector<8x128xf32>
      %c0_33 = arith.constant 0 : index
      %c0_34 = arith.constant 0 : index
      %117 = vector.load %arg5[%c0_33, %c0_34] : memref<32x128xf32, #tpu.memory_space<vmem>>, vector<32x128xf32>
      %cst_35 = arith.constant dense<0.000000e+00> : vector<8x128xf32>
      %118 = tpu.matmul %113, %117, %cst_35 {dimension_numbers = #tpu.dot_dimension_numbers<[1], [0], [0], [1], [0, 0, 1, 1], [], []>} : vector<8x32xf32>, vector<32x128xf32>, vector<8x128xf32> -> vector<8x128xf32>
      %119 = vector.broadcast %10 : vector<1x128xf32> to vector<8x128xf32>
      %120 = arith.addf %118, %119 : vector<8x128xf32>
      %121 = vector.extract_strided_slice %116 {offsets = [0, 0], sizes = [8, 64], strides = [1, 1]} : vector<8x128xf32> to vector<8x64xf32>
      %122 = vector.extract_strided_slice %120 {offsets = [0, 0], sizes = [8, 64], strides = [1, 1]} : vector<8x128xf32> to vector<8x64xf32>
      %123 = arith.addf %121, %122 : vector<8x64xf32>
      %124 = arith.negf %123 : vector<8x64xf32>
      %125 = math.exp %124 : vector<8x64xf32>
      %cst_36 = arith.constant 1.000000e+00 : f32
      %126 = vector.broadcast %cst_36 : f32 to vector<8x64xf32>
      %127 = arith.addf %126, %125 : vector<8x64xf32>
      %128 = arith.divf %126, %127 : vector<8x64xf32>
      %129 = vector.extract_strided_slice %128 {offsets = [0, 0], sizes = [8, 32], strides = [1, 1]} : vector<8x64xf32> to vector<8x32xf32>
      %130 = vector.extract_strided_slice %128 {offsets = [0, 32], sizes = [8, 32], strides = [1, 1]} : vector<8x64xf32> to vector<8x32xf32>
      %131 = vector.extract_strided_slice %116 {offsets = [0, 64], sizes = [8, 32], strides = [1, 1]} : vector<8x128xf32> to vector<8x32xf32>
      %132 = vector.extract_strided_slice %120 {offsets = [0, 64], sizes = [8, 32], strides = [1, 1]} : vector<8x128xf32> to vector<8x32xf32>
      %133 = arith.mulf %129, %132 : vector<8x32xf32>
      %134 = arith.addf %131, %133 : vector<8x32xf32>
      %135 = math.tanh %134 : vector<8x32xf32>
      %cst_37 = arith.constant 1.000000e+00 : f32
      %136 = vector.broadcast %cst_37 : f32 to vector<8x32xf32>
      %137 = arith.subf %136, %130 : vector<8x32xf32>
      %138 = arith.mulf %137, %135 : vector<8x32xf32>
      %139 = arith.mulf %130, %113 : vector<8x32xf32>
      %140 = arith.addf %138, %139 : vector<8x32xf32>
      %c8_i32_38 = arith.constant 8 : i32
      %141 = arith.muli %arg1, %c8_i32_38 : i32
      %142 = arith.addi %141, %c3_i32 : i32
      %143 = vector.broadcast %142 : i32 to vector<8x1xi32>
      %144 = arith.cmpi slt, %143, %9 : vector<8x1xi32>
      %145 = vector.shape_cast %144 : vector<8x1xi1> to vector<8x1xi1>
      %146 = vector.broadcast %145 : vector<8x1xi1> to vector<8x32xi1>
      %147 = arith.select %146, %140, %113 : vector<8x32xi1>, vector<8x32xf32>
      %c4_i32 = arith.constant 4 : i32
      %148 = arith.index_cast %c4_i32 : i32 to index
      %c0_39 = arith.constant 0 : index
      %c0_40 = arith.constant 0 : index
      %149 = vector.load %arg4[%148, %c0_39, %c0_40] : memref<8x8x128xf32, #tpu.memory_space<vmem>>, vector<1x8x128xf32>
      %150 = vector.shape_cast %149 : vector<1x8x128xf32> to vector<8x128xf32>
      %c0_41 = arith.constant 0 : index
      %c0_42 = arith.constant 0 : index
      %151 = vector.load %arg5[%c0_41, %c0_42] : memref<32x128xf32, #tpu.memory_space<vmem>>, vector<32x128xf32>
      %cst_43 = arith.constant dense<0.000000e+00> : vector<8x128xf32>
      %152 = tpu.matmul %147, %151, %cst_43 {dimension_numbers = #tpu.dot_dimension_numbers<[1], [0], [0], [1], [0, 0, 1, 1], [], []>} : vector<8x32xf32>, vector<32x128xf32>, vector<8x128xf32> -> vector<8x128xf32>
      %153 = vector.broadcast %10 : vector<1x128xf32> to vector<8x128xf32>
      %154 = arith.addf %152, %153 : vector<8x128xf32>
      %155 = vector.extract_strided_slice %150 {offsets = [0, 0], sizes = [8, 64], strides = [1, 1]} : vector<8x128xf32> to vector<8x64xf32>
      %156 = vector.extract_strided_slice %154 {offsets = [0, 0], sizes = [8, 64], strides = [1, 1]} : vector<8x128xf32> to vector<8x64xf32>
      %157 = arith.addf %155, %156 : vector<8x64xf32>
      %158 = arith.negf %157 : vector<8x64xf32>
      %159 = math.exp %158 : vector<8x64xf32>
      %cst_44 = arith.constant 1.000000e+00 : f32
      %160 = vector.broadcast %cst_44 : f32 to vector<8x64xf32>
      %161 = arith.addf %160, %159 : vector<8x64xf32>
      %162 = arith.divf %160, %161 : vector<8x64xf32>
      %163 = vector.extract_strided_slice %162 {offsets = [0, 0], sizes = [8, 32], strides = [1, 1]} : vector<8x64xf32> to vector<8x32xf32>
      %164 = vector.extract_strided_slice %162 {offsets = [0, 32], sizes = [8, 32], strides = [1, 1]} : vector<8x64xf32> to vector<8x32xf32>
      %165 = vector.extract_strided_slice %150 {offsets = [0, 64], sizes = [8, 32], strides = [1, 1]} : vector<8x128xf32> to vector<8x32xf32>
      %166 = vector.extract_strided_slice %154 {offsets = [0, 64], sizes = [8, 32], strides = [1, 1]} : vector<8x128xf32> to vector<8x32xf32>
      %167 = arith.mulf %163, %166 : vector<8x32xf32>
      %168 = arith.addf %165, %167 : vector<8x32xf32>
      %169 = math.tanh %168 : vector<8x32xf32>
      %cst_45 = arith.constant 1.000000e+00 : f32
      %170 = vector.broadcast %cst_45 : f32 to vector<8x32xf32>
      %171 = arith.subf %170, %164 : vector<8x32xf32>
      %172 = arith.mulf %171, %169 : vector<8x32xf32>
      %173 = arith.mulf %164, %147 : vector<8x32xf32>
      %174 = arith.addf %172, %173 : vector<8x32xf32>
      %c8_i32_46 = arith.constant 8 : i32
      %175 = arith.muli %arg1, %c8_i32_46 : i32
      %176 = arith.addi %175, %c4_i32 : i32
      %177 = vector.broadcast %176 : i32 to vector<8x1xi32>
      %178 = arith.cmpi slt, %177, %9 : vector<8x1xi32>
      %179 = vector.shape_cast %178 : vector<8x1xi1> to vector<8x1xi1>
      %180 = vector.broadcast %179 : vector<8x1xi1> to vector<8x32xi1>
      %181 = arith.select %180, %174, %147 : vector<8x32xi1>, vector<8x32xf32>
      %c5_i32 = arith.constant 5 : i32
      %182 = arith.index_cast %c5_i32 : i32 to index
      %c0_47 = arith.constant 0 : index
      %c0_48 = arith.constant 0 : index
      %183 = vector.load %arg4[%182, %c0_47, %c0_48] : memref<8x8x128xf32, #tpu.memory_space<vmem>>, vector<1x8x128xf32>
      %184 = vector.shape_cast %183 : vector<1x8x128xf32> to vector<8x128xf32>
      %c0_49 = arith.constant 0 : index
      %c0_50 = arith.constant 0 : index
      %185 = vector.load %arg5[%c0_49, %c0_50] : memref<32x128xf32, #tpu.memory_space<vmem>>, vector<32x128xf32>
      %cst_51 = arith.constant dense<0.000000e+00> : vector<8x128xf32>
      %186 = tpu.matmul %181, %185, %cst_51 {dimension_numbers = #tpu.dot_dimension_numbers<[1], [0], [0], [1], [0, 0, 1, 1], [], []>} : vector<8x32xf32>, vector<32x128xf32>, vector<8x128xf32> -> vector<8x128xf32>
      %187 = vector.broadcast %10 : vector<1x128xf32> to vector<8x128xf32>
      %188 = arith.addf %186, %187 : vector<8x128xf32>
      %189 = vector.extract_strided_slice %184 {offsets = [0, 0], sizes = [8, 64], strides = [1, 1]} : vector<8x128xf32> to vector<8x64xf32>
      %190 = vector.extract_strided_slice %188 {offsets = [0, 0], sizes = [8, 64], strides = [1, 1]} : vector<8x128xf32> to vector<8x64xf32>
      %191 = arith.addf %189, %190 : vector<8x64xf32>
      %192 = arith.negf %191 : vector<8x64xf32>
      %193 = math.exp %192 : vector<8x64xf32>
      %cst_52 = arith.constant 1.000000e+00 : f32
      %194 = vector.broadcast %cst_52 : f32 to vector<8x64xf32>
      %195 = arith.addf %194, %193 : vector<8x64xf32>
      %196 = arith.divf %194, %195 : vector<8x64xf32>
      %197 = vector.extract_strided_slice %196 {offsets = [0, 0], sizes = [8, 32], strides = [1, 1]} : vector<8x64xf32> to vector<8x32xf32>
      %198 = vector.extract_strided_slice %196 {offsets = [0, 32], sizes = [8, 32], strides = [1, 1]} : vector<8x64xf32> to vector<8x32xf32>
      %199 = vector.extract_strided_slice %184 {offsets = [0, 64], sizes = [8, 32], strides = [1, 1]} : vector<8x128xf32> to vector<8x32xf32>
      %200 = vector.extract_strided_slice %188 {offsets = [0, 64], sizes = [8, 32], strides = [1, 1]} : vector<8x128xf32> to vector<8x32xf32>
      %201 = arith.mulf %197, %200 : vector<8x32xf32>
      %202 = arith.addf %199, %201 : vector<8x32xf32>
      %203 = math.tanh %202 : vector<8x32xf32>
      %cst_53 = arith.constant 1.000000e+00 : f32
      %204 = vector.broadcast %cst_53 : f32 to vector<8x32xf32>
      %205 = arith.subf %204, %198 : vector<8x32xf32>
      %206 = arith.mulf %205, %203 : vector<8x32xf32>
      %207 = arith.mulf %198, %181 : vector<8x32xf32>
      %208 = arith.addf %206, %207 : vector<8x32xf32>
      %c8_i32_54 = arith.constant 8 : i32
      %209 = arith.muli %arg1, %c8_i32_54 : i32
      %210 = arith.addi %209, %c5_i32 : i32
      %211 = vector.broadcast %210 : i32 to vector<8x1xi32>
      %212 = arith.cmpi slt, %211, %9 : vector<8x1xi32>
      %213 = vector.shape_cast %212 : vector<8x1xi1> to vector<8x1xi1>
      %214 = vector.broadcast %213 : vector<8x1xi1> to vector<8x32xi1>
      %215 = arith.select %214, %208, %181 : vector<8x32xi1>, vector<8x32xf32>
      %c6_i32 = arith.constant 6 : i32
      %216 = arith.index_cast %c6_i32 : i32 to index
      %c0_55 = arith.constant 0 : index
      %c0_56 = arith.constant 0 : index
      %217 = vector.load %arg4[%216, %c0_55, %c0_56] : memref<8x8x128xf32, #tpu.memory_space<vmem>>, vector<1x8x128xf32>
      %218 = vector.shape_cast %217 : vector<1x8x128xf32> to vector<8x128xf32>
      %c0_57 = arith.constant 0 : index
      %c0_58 = arith.constant 0 : index
      %219 = vector.load %arg5[%c0_57, %c0_58] : memref<32x128xf32, #tpu.memory_space<vmem>>, vector<32x128xf32>
      %cst_59 = arith.constant dense<0.000000e+00> : vector<8x128xf32>
      %220 = tpu.matmul %215, %219, %cst_59 {dimension_numbers = #tpu.dot_dimension_numbers<[1], [0], [0], [1], [0, 0, 1, 1], [], []>} : vector<8x32xf32>, vector<32x128xf32>, vector<8x128xf32> -> vector<8x128xf32>
      %221 = vector.broadcast %10 : vector<1x128xf32> to vector<8x128xf32>
      %222 = arith.addf %220, %221 : vector<8x128xf32>
      %223 = vector.extract_strided_slice %218 {offsets = [0, 0], sizes = [8, 64], strides = [1, 1]} : vector<8x128xf32> to vector<8x64xf32>
      %224 = vector.extract_strided_slice %222 {offsets = [0, 0], sizes = [8, 64], strides = [1, 1]} : vector<8x128xf32> to vector<8x64xf32>
      %225 = arith.addf %223, %224 : vector<8x64xf32>
      %226 = arith.negf %225 : vector<8x64xf32>
      %227 = math.exp %226 : vector<8x64xf32>
      %cst_60 = arith.constant 1.000000e+00 : f32
      %228 = vector.broadcast %cst_60 : f32 to vector<8x64xf32>
      %229 = arith.addf %228, %227 : vector<8x64xf32>
      %230 = arith.divf %228, %229 : vector<8x64xf32>
      %231 = vector.extract_strided_slice %230 {offsets = [0, 0], sizes = [8, 32], strides = [1, 1]} : vector<8x64xf32> to vector<8x32xf32>
      %232 = vector.extract_strided_slice %230 {offsets = [0, 32], sizes = [8, 32], strides = [1, 1]} : vector<8x64xf32> to vector<8x32xf32>
      %233 = vector.extract_strided_slice %218 {offsets = [0, 64], sizes = [8, 32], strides = [1, 1]} : vector<8x128xf32> to vector<8x32xf32>
      %234 = vector.extract_strided_slice %222 {offsets = [0, 64], sizes = [8, 32], strides = [1, 1]} : vector<8x128xf32> to vector<8x32xf32>
      %235 = arith.mulf %231, %234 : vector<8x32xf32>
      %236 = arith.addf %233, %235 : vector<8x32xf32>
      %237 = math.tanh %236 : vector<8x32xf32>
      %cst_61 = arith.constant 1.000000e+00 : f32
      %238 = vector.broadcast %cst_61 : f32 to vector<8x32xf32>
      %239 = arith.subf %238, %232 : vector<8x32xf32>
      %240 = arith.mulf %239, %237 : vector<8x32xf32>
      %241 = arith.mulf %232, %215 : vector<8x32xf32>
      %242 = arith.addf %240, %241 : vector<8x32xf32>
      %c8_i32_62 = arith.constant 8 : i32
      %243 = arith.muli %arg1, %c8_i32_62 : i32
      %244 = arith.addi %243, %c6_i32 : i32
      %245 = vector.broadcast %244 : i32 to vector<8x1xi32>
      %246 = arith.cmpi slt, %245, %9 : vector<8x1xi32>
      %247 = vector.shape_cast %246 : vector<8x1xi1> to vector<8x1xi1>
      %248 = vector.broadcast %247 : vector<8x1xi1> to vector<8x32xi1>
      %249 = arith.select %248, %242, %215 : vector<8x32xi1>, vector<8x32xf32>
      %c7_i32 = arith.constant 7 : i32
      %250 = arith.index_cast %c7_i32 : i32 to index
      %c0_63 = arith.constant 0 : index
      %c0_64 = arith.constant 0 : index
      %251 = vector.load %arg4[%250, %c0_63, %c0_64] : memref<8x8x128xf32, #tpu.memory_space<vmem>>, vector<1x8x128xf32>
      %252 = vector.shape_cast %251 : vector<1x8x128xf32> to vector<8x128xf32>
      %c0_65 = arith.constant 0 : index
      %c0_66 = arith.constant 0 : index
      %253 = vector.load %arg5[%c0_65, %c0_66] : memref<32x128xf32, #tpu.memory_space<vmem>>, vector<32x128xf32>
      %cst_67 = arith.constant dense<0.000000e+00> : vector<8x128xf32>
      %254 = tpu.matmul %249, %253, %cst_67 {dimension_numbers = #tpu.dot_dimension_numbers<[1], [0], [0], [1], [0, 0, 1, 1], [], []>} : vector<8x32xf32>, vector<32x128xf32>, vector<8x128xf32> -> vector<8x128xf32>
      %255 = vector.broadcast %10 : vector<1x128xf32> to vector<8x128xf32>
      %256 = arith.addf %254, %255 : vector<8x128xf32>
      %257 = vector.extract_strided_slice %252 {offsets = [0, 0], sizes = [8, 64], strides = [1, 1]} : vector<8x128xf32> to vector<8x64xf32>
      %258 = vector.extract_strided_slice %256 {offsets = [0, 0], sizes = [8, 64], strides = [1, 1]} : vector<8x128xf32> to vector<8x64xf32>
      %259 = arith.addf %257, %258 : vector<8x64xf32>
      %260 = arith.negf %259 : vector<8x64xf32>
      %261 = math.exp %260 : vector<8x64xf32>
      %cst_68 = arith.constant 1.000000e+00 : f32
      %262 = vector.broadcast %cst_68 : f32 to vector<8x64xf32>
      %263 = arith.addf %262, %261 : vector<8x64xf32>
      %264 = arith.divf %262, %263 : vector<8x64xf32>
      %265 = vector.extract_strided_slice %264 {offsets = [0, 0], sizes = [8, 32], strides = [1, 1]} : vector<8x64xf32> to vector<8x32xf32>
      %266 = vector.extract_strided_slice %264 {offsets = [0, 32], sizes = [8, 32], strides = [1, 1]} : vector<8x64xf32> to vector<8x32xf32>
      %267 = vector.extract_strided_slice %252 {offsets = [0, 64], sizes = [8, 32], strides = [1, 1]} : vector<8x128xf32> to vector<8x32xf32>
      %268 = vector.extract_strided_slice %256 {offsets = [0, 64], sizes = [8, 32], strides = [1, 1]} : vector<8x128xf32> to vector<8x32xf32>
      %269 = arith.mulf %265, %268 : vector<8x32xf32>
      %270 = arith.addf %267, %269 : vector<8x32xf32>
      %271 = math.tanh %270 : vector<8x32xf32>
      %cst_69 = arith.constant 1.000000e+00 : f32
      %272 = vector.broadcast %cst_69 : f32 to vector<8x32xf32>
      %273 = arith.subf %272, %266 : vector<8x32xf32>
      %274 = arith.mulf %273, %271 : vector<8x32xf32>
      %275 = arith.mulf %266, %249 : vector<8x32xf32>
      %276 = arith.addf %274, %275 : vector<8x32xf32>
      %c8_i32_70 = arith.constant 8 : i32
      %277 = arith.muli %arg1, %c8_i32_70 : i32
      %278 = arith.addi %277, %c7_i32 : i32
      %279 = vector.broadcast %278 : i32 to vector<8x1xi32>
      %280 = arith.cmpi slt, %279, %9 : vector<8x1xi32>
      %281 = vector.shape_cast %280 : vector<8x1xi1> to vector<8x1xi1>
      %282 = vector.broadcast %281 : vector<8x1xi1> to vector<8x32xi1>
      %283 = arith.select %282, %276, %249 : vector<8x32xi1>, vector<8x32xf32>
      %c8_i32_71 = arith.constant 8 : i32
      %c0_72 = arith.constant 0 : index
      %c0_73 = arith.constant 0 : index
      %284 = vector.load %arg7[%c0_72, %c0_73] : memref<8x32xf32, #tpu.memory_space<vmem>>, vector<8x32xf32>
      tpu.vector_store %arg7[%c0_72, %c0_73], %283 {strides = array<i32>} : memref<8x32xf32, #tpu.memory_space<vmem>>, vector<8x32xf32>,
    } else {
    }
    return
  }
  func.func @transform_0(%arg0: i32, %arg1: i32, %arg2: memref<1xi32, #tpu.memory_space<smem>>) -> (i32, i32) {
    %c0_i32 = arith.constant 0 : i32
    %c0_i32_0 = arith.constant 0 : i32
    return %arg0, %c0_i32 : i32, i32
  }
  func.func @transform_1(%arg0: i32, %arg1: i32, %arg2: memref<1xi32, #tpu.memory_space<smem>>) -> (i32, i32, i32) {
    %c0_i32 = arith.constant 0 : i32
    %c0_i32_0 = arith.constant 0 : i32
    return %arg1, %arg0, %c0_i32 : i32, i32, i32
  }
  func.func @transform_2(%arg0: i32, %arg1: i32, %arg2: memref<1xi32, #tpu.memory_space<smem>>) -> (i32, i32) {
    %c0_i32 = arith.constant 0 : i32
    %c0_i32_0 = arith.constant 0 : i32
    %c0_i32_1 = arith.constant 0 : i32
    return %c0_i32, %c0_i32_0 : i32, i32
  }
  func.func @transform_3(%arg0: i32, %arg1: i32, %arg2: memref<1xi32, #tpu.memory_space<smem>>) -> (i32, i32) {
    %c0_i32 = arith.constant 0 : i32
    %c0_i32_0 = arith.constant 0 : i32
    %c0_i32_1 = arith.constant 0 : i32
    return %c0_i32, %c0_i32_0 : i32, i32
  }
  func.func @transform_4(%arg0: i32, %arg1: i32, %arg2: memref<1xi32, #tpu.memory_space<smem>>) -> (i32, i32) {
    %c0_i32 = arith.constant 0 : i32
    %c0_i32_0 = arith.constant 0 : i32
    return %arg0, %c0_i32 : i32, i32
  }
}

</mosaic_0001>

<llo_original>
// kernel: tpu_custom_call.1
$region0: #{tpu_custom_call.1}
  #allocation0 [shape = 'u32[]', space=smem, size = 0x4, offset = 0x4, fixed_abs, tag = 'smem constant byte address 0x4 - core index']
  #allocation1 [shape = 'u32[72,128]{1,0:T(1,128)}', space=vmem, size = 0x9000, scoped, tag = 'internal scratch']
  #allocation2 [shape = 's32[1]{0}', space=sflag, size = 0x4, scoped, tag = 'scoped memory for tpu_custom_call.1']
  #allocation3 [shape = 's32[1]{0:T(128)S(6)}', space=smem, size = 0x200, scoped, tag = 'prefetched SMEM operand 0']
  %s0 = inlined_call_operand.<no memory space> [shape: s32[1], index: 0, kind: input, shape index: {}]
  %s1 = inlined_call_operand.vmem [shape: s32[8,1], index: 1, kind: input, shape index: {}]
  %s2 = inlined_call_operand.hbm [shape: f32[8,8,128], index: 2, kind: input, shape index: {}]
  %s3 = inlined_call_operand.hbm [shape: f32[32,128], index: 3, kind: input, shape index: {}]
  %s4 = inlined_call_operand.vmem [shape: f32[1,128], index: 4, kind: input, shape index: {}]
  %s5 = inlined_call_operand.hbm [shape: f32[8,32], index: 5, kind: output, shape index: {}]
  %s6 = sld [smem:[#allocation0]]
  $region42: #{tpu_custom_call.1} parent=0
    _
  %s8 = ssub.s32 1, %s6
  %s9 = scalar_select 0, %s8, %s6
  %10 = sst [smem:[#allocation3]] %s0
  $region1: #{tpu_custom_call.1} parent=0
    #allocation4 [shape = 'u8[32768]{0}', space=vmem, size = 0x8000, scoped, tag = 'input window, operand 2, single buffered']
    #allocation5 [shape = 's32[1]{0}', space=sflag, size = 0x4, scoped, tag = 'scoped memory for tpu_custom_call.1']
    #allocation6 [shape = 's32[1]{0}', space=sflag, size = 0x4, scoped, tag = 'scoped memory for tpu_custom_call.1']
    #allocation7 [shape = 'u8[16384]{0}', space=vmem, size = 0x4000, scoped, tag = 'input window, operand 3, single buffered']
    #allocation8 [shape = 's32[1]{0}', space=sflag, size = 0x4, scoped, tag = 'scoped memory for tpu_custom_call.1']
    #allocation9 [shape = 'u8[4096]{0}', space=vmem, size = 0x1000, scoped, tag = 'output window, operand 0, single buffered']
    %11 = vsyncpa [#allocation5], 0
    %12 = vsyncpa [#allocation8], 0
    %13 = vsyncpa [#allocation6], 0
    // Predicated region
    $region2: #{tpu_custom_call.1} parent=1 // pred_check
      _
    $region3: #{tpu_custom_call.1} parent=1 // pred_check_branch
      %15 = sbr.rel (0) target = $region5
    $region4: #{tpu_custom_call.1} parent=1 // pred_region
      _
    $region5: #{tpu_custom_call.1} parent=1 // pred_fallthru
      _
    // Predicated region
    $region6: #{tpu_custom_call.1} parent=1 // pred_check
      _
    $region7: #{tpu_custom_call.1} parent=1 // pred_check_branch
      %17 = sbr.rel (0) target = $region9
    $region8: #{tpu_custom_call.1} parent=1 // pred_region
      %19 = vsyncadd [#allocation5], 0
      %s20 = sshll.u32 %s2, 4
      %s21 = int_to_ptr.hbm [resolvable:$true] %s20
      %s22 = sshll.u32 [#allocation4], 4
      %s23 = int_to_ptr.vmem [resolvable:$true] %s22
      %28 = dma.hbm_to_vmem [thread:$0]  %s21, 1024, %s23, [#allocation5], 128, 128, 8
    $region9: #{tpu_custom_call.1} parent=1 // pred_fallthru
      _
    // Predicated region
    $region10: #{tpu_custom_call.1} parent=1 // pred_check
      _
    $region11: #{tpu_custom_call.1} parent=1 // pred_check_branch
      %30 = sbr.rel (0) target = $region13
    $region12: #{tpu_custom_call.1} parent=1 // pred_region
      %32 = vsyncadd [#allocation8], 0
      %s33 = sshll.u32 %s3, 4
      %s34 = int_to_ptr.hbm [resolvable:$true] %s33
      %s35 = sshll.u32 [#allocation7], 4
      %s36 = int_to_ptr.vmem [resolvable:$true] %s35
      %41 = dma.hbm_to_vmem [thread:$0]  %s34, 512, %s36, [#allocation8], 128, 128, 8
    $region13: #{tpu_custom_call.1} parent=1 // pred_fallthru
      _
    // Predicated region
    $region14: #{tpu_custom_call.1} parent=1 // pred_check
      _
    $region15: #{tpu_custom_call.1} parent=1 // pred_check_branch
      %43 = sbr.rel (0) target = $region17
    $region16: #{tpu_custom_call.1} parent=1 // pred_region
      _
    $region17: #{tpu_custom_call.1} parent=1 // pred_fallthru
      _
    // Predicated region
    $region18: #{tpu_custom_call.1} parent=1 // pred_check
      _
    $region19: #{tpu_custom_call.1} parent=1 // pred_check_branch
      %45 = sbr.rel (0) target = $region21
    $region20: #{tpu_custom_call.1} parent=1 // pred_region
      %47 = dma.done [#allocation5], 1024
    $region21: #{tpu_custom_call.1} parent=1 // pred_fallthru
      _
    // Predicated region
    $region22: #{tpu_custom_call.1} parent=1 // pred_check
      _
    $region23: #{tpu_custom_call.1} parent=1 // pred_check_branch
      %49 = sbr.rel (0) target = $region25
    $region24: #{tpu_custom_call.1} parent=1 // pred_region
      %51 = dma.done [#allocation8], 512
    $region25: #{tpu_custom_call.1} parent=1 // pred_fallthru
      _
    %p52 = scmp.eq.s32.totalorder 0, 0
    // Predicated region
    $region26: #{tpu_custom_call.1} parent=1 // pred_check
      %p53 = pneg %p52
    $region27: #{tpu_custom_call.1} parent=1 // pred_check_branch
      %55 = sbr.rel (%p53) target = $region29
    $region28: #{tpu_custom_call.1} parent=1 // pred_region
      %vm56 = vcmask 261120
      %57 = vst.msk [vmem:[#allocation9] sm:$0xff] %vm56, 0.0
    $region29: #{tpu_custom_call.1} parent=1 // pred_fallthru
      _
    %s58 = sld [smem:[#allocation3]]
    %s59 = smul.u32 0, 8
    %p60 = scmp.lt.s32.totalorder %s59, %s58
    // Predicated region
    $region30: #{tpu_custom_call.1} parent=1 // pred_check
      %p61 = pneg %p60
    $region31: #{tpu_custom_call.1} parent=1 // pred_check_branch
      %63 = sbr.rel (%p61) target = $region33
    $region32: #{tpu_custom_call.1} parent=1 // pred_region
      %v64 = vld [vmem:[%s1] sm:$0xff]
      %v65 = vld [vmem:[%s4] sm:$0x1]
      %v66 = vld [vmem:[#allocation9] sm:$0xff]
      %v67 = vld [vmem:[#allocation4] sm:$0xff]
      %v68 = vld [vmem:[#allocation7] sm:$0xff]
      %v69 = vld [vmem:[#allocation7 + $0x8] sm:$0xff]
      %v70 = vld [vmem:[#allocation7 + $0x10] sm:$0xff]
      %v71 = vld [vmem:[#allocation7 + $0x18] sm:$0xff]
      %v73 = vperm.slane %v65, 0
      %vm75 = vcmask 261120
      %v77 = vsel %vm75, %v66, 0
      %79 = vmatpush.msra.mxu0 0.0
      %80 = vmatpush.msra.mxu0 0.0
      %81 = vmatpush.msra.mxu0 0.0
      %82 = vmatpush.msra.mxu0 0.0
      %83 = vmatpush.msra.mxu0 0.0
      %84 = vmatpush.msra.mxu0 0.0
      %85 = vmatpush.msra.mxu0 0.0
      %86 = vmatpush.msra.mxu0 0.0
      %87 = vmatpush.msra.mxu0 0.0
      %88 = vmatpush.msra.mxu0 0.0
      %89 = vmatpush.msra.mxu0 0.0
      %90 = vmatpush.msra.mxu0 0.0
      %91 = vmatpush.msra.mxu0 %v71
      %92 = vmatpush.msra.mxu0 %v70
      %93 = vmatpush.msra.mxu0 %v69
      %94 = vmatpush.msra.mxu0 %v68
      %95 = vmatmul.f32.gmra.mxu0 %v77
      %v96 = vpop.f32.mrf.mxu0
      %v97 = vadd.f32 %v73, %v96
      %98 = vdwg.mxu0
      %v99 = vadd.f32 %v67, %v97
      %v100 = vxor.u32 %v99, 2147483648
      %v101 = vmul.f32 %v100, 1.442695
      %v102 = vpow.pop %v101
      %v103 = vadd.f32 %v102, 1.0
      %v104 = vrcp.pop %v103
      %v105 = vmul.f32 %v103, %v104
      %v106 = vsub.f32 1.0, %v105
      %v107 = vmul.f32 %v104, %v106
      %v108 = vadd.f32 %v104, %v107
      %vm109 = vweird.f32 %v103
      %vm110 = vweird.f32 %v104
      %vm111 = vmor %vm109, %vm110
      %v112 = vsel %vm111, %v104, %v108
      %v113 = vand.u32 2147483647, %v103
      %vm114 = vcmp.eq.f32.partialorder %v113, 8.507059e+37
      %v115 = vand.u32 %v103, 2147483648
      %v116 = vor.u32 1.1754944e-38, %v115
      %v117 = vsel %vm114, %v116, %v112
      %v118 = vmul.f32 1.0, %v117
      %120 = vrot.lane.b32.xlu0 %v97, 64
      %v121 = vpop.permute.xlu0 %120
      %v123 = vmul.f32 %v118, %v121
      %125 = vrot.lane.b32.xlu0 %v123, 64
      %v126 = vpop.permute.xlu0 %125
      %v128 = vadd.f32 %v67, %v126
      %v129 = vtanh.pop %v128
      %v130 = vsub.f32 1.0, %v118
      %132 = vrot.lane.b32.xlu0 %v129, 96
      %v133 = vpop.permute.xlu0 %132
      %v135 = vmul.f32 %v130, %v133
      %136 = vrot.lane.b32.xlu0 %v66, 32
      %v137 = vpop.permute.xlu0 %136
      %v139 = vmul.f32 %v118, %v137
      %v140 = vadd.f32 %v135, %v139
      %v141 = vstv %s59
      %vm142 = vcmp.lt.s32.totalorder %v141, %v64
      %v143 = vsel %vm142, 1, 0
      %144 = vset.pattern.permute.xlu0 0
      %145 = vperm.xlu0 %144, %v143
      %v146 = vpop.permute.xlu0 %145
      %vm147 = vcmp.eq.s32.totalorder %v146, 1
      %v148 = vsel %vm147, %v140, %v137
      %s149 = scalar_lea.vmem [#allocation4], 8
      %v150 = vld [vmem:[%s149] sm:$0xff]
      %152 = vrot.lane.b32.xlu0 %v148, 96
      %v153 = vpop.permute.xlu0 %152
      %v154 = vsel %vm75, %v153, 0
      %156 = vmatpush.msra.mxu0 0.0
      %157 = vmatpush.msra.mxu0 0.0
      %158 = vmatpush.msra.mxu0 0.0
      %159 = vmatpush.msra.mxu0 0.0
      %160 = vmatpush.msra.mxu0 0.0
      %161 = vmatpush.msra.mxu0 0.0
      %162 = vmatpush.msra.mxu0 0.0
      %163 = vmatpush.msra.mxu0 0.0
      %164 = vmatpush.msra.mxu0 0.0
      %165 = vmatpush.msra.mxu0 0.0
      %166 = vmatpush.msra.mxu0 0.0
      %167 = vmatpush.msra.mxu0 0.0
      %168 = vmatpush.msra.mxu0 %v71
      %169 = vmatpush.msra.mxu0 %v70
      %170 = vmatpush.msra.mxu0 %v69
      %171 = vmatpush.msra.mxu0 %v68
      %172 = vmatmul.f32.gmra.mxu0 %v154
      %v173 = vpop.f32.mrf.mxu0
      %v174 = vadd.f32 %v73, %v173
      %175 = vdwg.mxu0
      %v176 = vadd.f32 %v150, %v174
      %v177 = vxor.u32 %v176, 2147483648
      %v178 = vmul.f32 %v177, 1.442695
      %v179 = vpow.pop %v178
      %v180 = vadd.f32 %v179, 1.0
      %v181 = vrcp.pop %v180
      %v182 = vmul.f32 %v180, %v181
      %v183 = vsub.f32 1.0, %v182
      %v184 = vmul.f32 %v181, %v183
      %v185 = vadd.f32 %v181, %v184
      %vm186 = vweird.f32 %v180
      %vm187 = vweird.f32 %v181
      %vm188 = vmor %vm186, %vm187
      %v189 = vsel %vm188, %v181, %v185
      %v190 = vand.u32 2147483647, %v180
      %vm191 = vcmp.eq.f32.partialorder %v190, 8.507059e+37
      %v192 = vand.u32 %v180, 2147483648
      %v193 = vor.u32 1.1754944e-38, %v192
      %v194 = vsel %vm191, %v193, %v189
      %v195 = vmul.f32 1.0, %v194
      %197 = vrot.lane.b32.xlu0 %v174, 64
      %v198 = vpop.permute.xlu0 %197
      %v200 = vmul.f32 %v195, %v198
      %202 = vrot.lane.b32.xlu0 %v200, 64
      %v203 = vpop.permute.xlu0 %202
      %v205 = vadd.f32 %v150, %v203
      %v206 = vtanh.pop %v205
      %v207 = vsub.f32 1.0, %v195
      %209 = vrot.lane.b32.xlu0 %v206, 96
      %v210 = vpop.permute.xlu0 %209
      %v212 = vmul.f32 %v207, %v210
      %v213 = vmul.f32 %v195, %v148
      %v214 = vadd.f32 %v212, %v213
      %s215 = sadd.s32 %s59, 1
      %v216 = vstv %s215
      %vm217 = vcmp.lt.s32.totalorder %v216, %v64
      %v218 = vsel %vm217, 1, 0
      %219 = vset.pattern.permute.xlu0 0
      %220 = vperm.xlu0 %219, %v218
      %v221 = vpop.permute.xlu0 %220
      %vm222 = vcmp.eq.s32.totalorder %v221, 1
      %v223 = vsel %vm222, %v214, %v148
      %s224 = scalar_lea.vmem [#allocation4], 16
      %v225 = vld [vmem:[%s224] sm:$0xff]
      %227 = vrot.lane.b32.xlu0 %v223, 96
      %v228 = vpop.permute.xlu0 %227
      %v229 = vsel %vm75, %v228, 0
      %231 = vmatpush.msra.mxu0 0.0
      %232 = vmatpush.msra.mxu0 0.0
      %233 = vmatpush.msra.mxu0 0.0
      %234 = vmatpush.msra.mxu0 0.0
      %235 = vmatpush.msra.mxu0 0.0
      %236 = vmatpush.msra.mxu0 0.0
      %237 = vmatpush.msra.mxu0 0.0
      %238 = vmatpush.msra.mxu0 0.0
      %239 = vmatpush.msra.mxu0 0.0
      %240 = vmatpush.msra.mxu0 0.0
      %241 = vmatpush.msra.mxu0 0.0
      %242 = vmatpush.msra.mxu0 0.0
      %243 = vmatpush.msra.mxu0 %v71
      %244 = vmatpush.msra.mxu0 %v70
      %245 = vmatpush.msra.mxu0 %v69
      %246 = vmatpush.msra.mxu0 %v68
      %247 = vmatmul.f32.gmra.mxu0 %v229
      %v248 = vpop.f32.mrf.mxu0
      %v249 = vadd.f32 %v73, %v248
      %250 = vdwg.mxu0
      %v251 = vadd.f32 %v225, %v249
      %v252 = vxor.u32 %v251, 2147483648
      %v253 = vmul.f32 %v252, 1.442695
      %v254 = vpow.pop %v253
      %v255 = vadd.f32 %v254, 1.0
      %v256 = vrcp.pop %v255
      %v257 = vmul.f32 %v255, %v256
      %v258 = vsub.f32 1.0, %v257
      %v259 = vmul.f32 %v256, %v258
      %v260 = vadd.f32 %v256, %v259
      %vm261 = vweird.f32 %v255
      %vm262 = vweird.f32 %v256
      %vm263 = vmor %vm261, %vm262
      %v264 = vsel %vm263, %v256, %v260
      %v265 = vand.u32 2147483647, %v255
      %vm266 = vcmp.eq.f32.partialorder %v265, 8.507059e+37
      %v267 = vand.u32 %v255, 2147483648
      %v268 = vor.u32 1.1754944e-38, %v267
      %v269 = vsel %vm266, %v268, %v264
      %v270 = vmul.f32 1.0, %v269
      %272 = vrot.lane.b32.xlu0 %v249, 64
      %v273 = vpop.permute.xlu0 %272
      %v275 = vmul.f32 %v270, %v273
      %277 = vrot.lane.b32.xlu0 %v275, 64
      %v278 = vpop.permute.xlu0 %277
      %v280 = vadd.f32 %v225, %v278
      %v281 = vtanh.pop %v280
      %v282 = vsub.f32 1.0, %v270
      %284 = vrot.lane.b32.xlu0 %v281, 96
      %v285 = vpop.permute.xlu0 %284
      %v287 = vmul.f32 %v282, %v285
      %v288 = vmul.f32 %v270, %v223
      %v289 = vadd.f32 %v287, %v288
      %s290 = sadd.s32 %s59, 2
      %v291 = vstv %s290
      %vm292 = vcmp.lt.s32.totalorder %v291, %v64
      %v293 = vsel %vm292, 1, 0
      %294 = vset.pattern.permute.xlu0 0
      %295 = vperm.xlu0 %294, %v293
      %v296 = vpop.permute.xlu0 %295
      %vm297 = vcmp.eq.s32.totalorder %v296, 1
      %v298 = vsel %vm297, %v289, %v223
      %s299 = scalar_lea.vmem [#allocation4], 24
      %v300 = vld [vmem:[%s299] sm:$0xff]
      %302 = vrot.lane.b32.xlu0 %v298, 96
      %v303 = vpop.permute.xlu0 %302
      %v304 = vsel %vm75, %v303, 0
      %306 = vmatpush.msra.mxu0 0.0
      %307 = vmatpush.msra.mxu0 0.0
      %308 = vmatpush.msra.mxu0 0.0
      %309 = vmatpush.msra.mxu0 0.0
      %310 = vmatpush.msra.mxu0 0.0
      %311 = vmatpush.msra.mxu0 0.0
      %312 = vmatpush.msra.mxu0 0.0
      %313 = vmatpush.msra.mxu0 0.0
      %314 = vmatpush.msra.mxu0 0.0
      %315 = vmatpush.msra.mxu0 0.0
      %316 = vmatpush.msra.mxu0 0.0
      %317 = vmatpush.msra.mxu0 0.0
      %318 = vmatpush.msra.mxu0 %v71
      %319 = vmatpush.msra.mxu0 %v70
      %320 = vmatpush.msra.mxu0 %v69
      %321 = vmatpush.msra.mxu0 %v68
      %322 = vmatmul.f32.gmra.mxu0 %v304
      %v323 = vpop.f32.mrf.mxu0
      %v324 = vadd.f32 %v73, %v323
      %325 = vdwg.mxu0
      %v326 = vadd.f32 %v300, %v324
      %v327 = vxor.u32 %v326, 2147483648
      %v328 = vmul.f32 %v327, 1.442695
      %v329 = vpow.pop %v328
      %v330 = vadd.f32 %v329, 1.0
      %v331 = vrcp.pop %v330
      %v332 = vmul.f32 %v330, %v331
      %v333 = vsub.f32 1.0, %v332
      %v334 = vmul.f32 %v331, %v333
      %v335 = vadd.f32 %v331, %v334
      %vm336 = vweird.f32 %v330
      %vm337 = vweird.f32 %v331
      %vm338 = vmor %vm336, %vm337
      %v339 = vsel %vm338, %v331, %v335
      %v340 = vand.u32 2147483647, %v330
      %vm341 = vcmp.eq.f32.partialorder %v340, 8.507059e+37
      %v342 = vand.u32 %v330, 2147483648
      %v343 = vor.u32 1.1754944e-38, %v342
      %v344 = vsel %vm341, %v343, %v339
      %v345 = vmul.f32 1.0, %v344
      %347 = vrot.lane.b32.xlu0 %v324, 64
      %v348 = vpop.permute.xlu0 %347
      %v350 = vmul.f32 %v345, %v348
      %352 = vrot.lane.b32.xlu0 %v350, 64
      %v353 = vpop.permute.xlu0 %352
      %v355 = vadd.f32 %v300, %v353
      %v356 = vtanh.pop %v355
      %v357 = vsub.f32 1.0, %v345
      %359 = vrot.lane.b32.xlu0 %v356, 96
      %v360 = vpop.permute.xlu0 %359
      %v362 = vmul.f32 %v357, %v360
      %v363 = vmul.f32 %v345, %v298
      %v364 = vadd.f32 %v362, %v363
      %s365 = sadd.s32 %s59, 3
      %v366 = vstv %s365
      %vm367 = vcmp.lt.s32.totalorder %v366, %v64
      %v368 = vsel %vm367, 1, 0
      %369 = vset.pattern.permute.xlu0 0
      %370 = vperm.xlu0 %369, %v368
      %v371 = vpop.permute.xlu0 %370
      %vm372 = vcmp.eq.s32.totalorder %v371, 1
      %v373 = vsel %vm372, %v364, %v298
      %s374 = scalar_lea.vmem [#allocation4], 32
      %v375 = vld [vmem:[%s374] sm:$0xff]
      %377 = vrot.lane.b32.xlu0 %v373, 96
      %v378 = vpop.permute.xlu0 %377
      %v379 = vsel %vm75, %v378, 0
      %381 = vmatpush.msra.mxu0 0.0
      %382 = vmatpush.msra.mxu0 0.0
      %383 = vmatpush.msra.mxu0 0.0
      %384 = vmatpush.msra.mxu0 0.0
      %385 = vmatpush.msra.mxu0 0.0
      %386 = vmatpush.msra.mxu0 0.0
      %387 = vmatpush.msra.mxu0 0.0
      %388 = vmatpush.msra.mxu0 0.0
      %389 = vmatpush.msra.mxu0 0.0
      %390 = vmatpush.msra.mxu0 0.0
      %391 = vmatpush.msra.mxu0 0.0
      %392 = vmatpush.msra.mxu0 0.0
      %393 = vmatpush.msra.mxu0 %v71
      %394 = vmatpush.msra.mxu0 %v70
      %395 = vmatpush.msra.mxu0 %v69
      %396 = vmatpush.msra.mxu0 %v68
      %397 = vmatmul.f32.gmra.mxu0 %v379
      %v398 = vpop.f32.mrf.mxu0
      %v399 = vadd.f32 %v73, %v398
      %400 = vdwg.mxu0
      %v401 = vadd.f32 %v375, %v399
      %v402 = vxor.u32 %v401, 2147483648
      %v403 = vmul.f32 %v402, 1.442695
      %v404 = vpow.pop %v403
      %v405 = vadd.f32 %v404, 1.0
      %v406 = vrcp.pop %v405
      %v407 = vmul.f32 %v405, %v406
      %v408 = vsub.f32 1.0, %v407
      %v409 = vmul.f32 %v406, %v408
      %v410 = vadd.f32 %v406, %v409
      %vm411 = vweird.f32 %v405
      %vm412 = vweird.f32 %v406
      %vm413 = vmor %vm411, %vm412
      %v414 = vsel %vm413, %v406, %v410
      %v415 = vand.u32 2147483647, %v405
      %vm416 = vcmp.eq.f32.partialorder %v415, 8.507059e+37
      %v417 = vand.u32 %v405, 2147483648
      %v418 = vor.u32 1.1754944e-38, %v417
      %v419 = vsel %vm416, %v418, %v414
      %v420 = vmul.f32 1.0, %v419
      %422 = vrot.lane.b32.xlu0 %v399, 64
      %v423 = vpop.permute.xlu0 %422
      %v425 = vmul.f32 %v420, %v423
      %427 = vrot.lane.b32.xlu0 %v425, 64
      %v428 = vpop.permute.xlu0 %427
      %v430 = vadd.f32 %v375, %v428
      %v431 = vtanh.pop %v430
      %v432 = vsub.f32 1.0, %v420
      %434 = vrot.lane.b32.xlu0 %v431, 96
      %v435 = vpop.permute.xlu0 %434
      %v437 = vmul.f32 %v432, %v435
      %v438 = vmul.f32 %v420, %v373
      %v439 = vadd.f32 %v437, %v438
      %s440 = sadd.s32 %s59, 4
      %v441 = vstv %s440
      %vm442 = vcmp.lt.s32.totalorder %v441, %v64
      %v443 = vsel %vm442, 1, 0
      %444 = vset.pattern.permute.xlu0 0
      %445 = vperm.xlu0 %444, %v443
      %v446 = vpop.permute.xlu0 %445
      %vm447 = vcmp.eq.s32.totalorder %v446, 1
      %v448 = vsel %vm447, %v439, %v373
      %s449 = scalar_lea.vmem [#allocation4], 40
      %v450 = vld [vmem:[%s449] sm:$0xff]
      %452 = vrot.lane.b32.xlu0 %v448, 96
      %v453 = vpop.permute.xlu0 %452
      %v454 = vsel %vm75, %v453, 0
      %456 = vmatpush.msra.mxu0 0.0
      %457 = vmatpush.msra.mxu0 0.0
      %458 = vmatpush.msra.mxu0 0.0
      %459 = vmatpush.msra.mxu0 0.0
      %460 = vmatpush.msra.mxu0 0.0
      %461 = vmatpush.msra.mxu0 0.0
      %462 = vmatpush.msra.mxu0 0.0
      %463 = vmatpush.msra.mxu0 0.0
      %464 = vmatpush.msra.mxu0 0.0
      %465 = vmatpush.msra.mxu0 0.0
      %466 = vmatpush.msra.mxu0 0.0
      %467 = vmatpush.msra.mxu0 0.0
      %468 = vmatpush.msra.mxu0 %v71
      %469 = vmatpush.msra.mxu0 %v70
      %470 = vmatpush.msra.mxu0 %v69
      %471 = vmatpush.msra.mxu0 %v68
      %472 = vmatmul.f32.gmra.mxu0 %v454
      %v473 = vpop.f32.mrf.mxu0
      %v474 = vadd.f32 %v73, %v473
      %475 = vdwg.mxu0
      %v476 = vadd.f32 %v450, %v474
      %v477 = vxor.u32 %v476, 2147483648
      %v478 = vmul.f32 %v477, 1.442695
      %v479 = vpow.pop %v478
      %v480 = vadd.f32 %v479, 1.0
      %v481 = vrcp.pop %v480
      %v482 = vmul.f32 %v480, %v481
      %v483 = vsub.f32 1.0, %v482
      %v484 = vmul.f32 %v481, %v483
      %v485 = vadd.f32 %v481, %v484
      %vm486 = vweird.f32 %v480
      %vm487 = vweird.f32 %v481
      %vm488 = vmor %vm486, %vm487
      %v489 = vsel %vm488, %v481, %v485
      %v490 = vand.u32 2147483647, %v480
      %vm491 = vcmp.eq.f32.partialorder %v490, 8.507059e+37
      %v492 = vand.u32 %v480, 2147483648
      %v493 = vor.u32 1.1754944e-38, %v492
      %v494 = vsel %vm491, %v493, %v489
      %v495 = vmul.f32 1.0, %v494
      %497 = vrot.lane.b32.xlu0 %v474, 64
      %v498 = vpop.permute.xlu0 %497
      %v500 = vmul.f32 %v495, %v498
      %502 = vrot.lane.b32.xlu0 %v500, 64
      %v503 = vpop.permute.xlu0 %502
      %v505 = vadd.f32 %v450, %v503
      %v506 = vtanh.pop %v505
      %v507 = vsub.f32 1.0, %v495
      %509 = vrot.lane.b32.xlu0 %v506, 96
      %v510 = vpop.permute.xlu0 %509
      %v512 = vmul.f32 %v507, %v510
      %v513 = vmul.f32 %v495, %v448
      %v514 = vadd.f32 %v512, %v513
      %s515 = sadd.s32 %s59, 5
      %v516 = vstv %s515
      %vm517 = vcmp.lt.s32.totalorder %v516, %v64
      %v518 = vsel %vm517, 1, 0
      %519 = vset.pattern.permute.xlu0 0
      %520 = vperm.xlu0 %519, %v518
      %v521 = vpop.permute.xlu0 %520
      %vm522 = vcmp.eq.s32.totalorder %v521, 1
      %v523 = vsel %vm522, %v514, %v448
      %s524 = scalar_lea.vmem [#allocation4], 48
      %v525 = vld [vmem:[%s524] sm:$0xff]
      %527 = vrot.lane.b32.xlu0 %v523, 96
      %v528 = vpop.permute.xlu0 %527
      %v529 = vsel %vm75, %v528, 0
      %531 = vmatpush.msra.mxu0 0.0
      %532 = vmatpush.msra.mxu0 0.0
      %533 = vmatpush.msra.mxu0 0.0
      %534 = vmatpush.msra.mxu0 0.0
      %535 = vmatpush.msra.mxu0 0.0
      %536 = vmatpush.msra.mxu0 0.0
      %537 = vmatpush.msra.mxu0 0.0
      %538 = vmatpush.msra.mxu0 0.0
      %539 = vmatpush.msra.mxu0 0.0
      %540 = vmatpush.msra.mxu0 0.0
      %541 = vmatpush.msra.mxu0 0.0
      %542 = vmatpush.msra.mxu0 0.0
      %543 = vmatpush.msra.mxu0 %v71
      %544 = vmatpush.msra.mxu0 %v70
      %545 = vmatpush.msra.mxu0 %v69
      %546 = vmatpush.msra.mxu0 %v68
      %547 = vmatmul.f32.gmra.mxu0 %v529
      %v548 = vpop.f32.mrf.mxu0
      %v549 = vadd.f32 %v73, %v548
      %550 = vdwg.mxu0
      %v551 = vadd.f32 %v525, %v549
      %v552 = vxor.u32 %v551, 2147483648
      %v553 = vmul.f32 %v552, 1.442695
      %v554 = vpow.pop %v553
      %v555 = vadd.f32 %v554, 1.0
      %v556 = vrcp.pop %v555
      %v557 = vmul.f32 %v555, %v556
      %v558 = vsub.f32 1.0, %v557
      %v559 = vmul.f32 %v556, %v558
      %v560 = vadd.f32 %v556, %v559
      %vm561 = vweird.f32 %v555
      %vm562 = vweird.f32 %v556
      %vm563 = vmor %vm561, %vm562
      %v564 = vsel %vm563, %v556, %v560
      %v565 = vand.u32 2147483647, %v555
      %vm566 = vcmp.eq.f32.partialorder %v565, 8.507059e+37
      %v567 = vand.u32 %v555, 2147483648
      %v568 = vor.u32 1.1754944e-38, %v567
      %v569 = vsel %vm566, %v568, %v564
      %v570 = vmul.f32 1.0, %v569
      %572 = vrot.lane.b32.xlu0 %v549, 64
      %v573 = vpop.permute.xlu0 %572
      %v575 = vmul.f32 %v570, %v573
      %577 = vrot.lane.b32.xlu0 %v575, 64
      %v578 = vpop.permute.xlu0 %577
      %v580 = vadd.f32 %v525, %v578
      %v581 = vtanh.pop %v580
      %v582 = vsub.f32 1.0, %v570
      %584 = vrot.lane.b32.xlu0 %v581, 96
      %v585 = vpop.permute.xlu0 %584
      %v587 = vmul.f32 %v582, %v585
      %v588 = vmul.f32 %v570, %v523
      %v589 = vadd.f32 %v587, %v588
      %s590 = sadd.s32 %s59, 6
      %v591 = vstv %s590
      %vm592 = vcmp.lt.s32.totalorder %v591, %v64
      %v593 = vsel %vm592, 1, 0
      %594 = vset.pattern.permute.xlu0 0
      %595 = vperm.xlu0 %594, %v593
      %v596 = vpop.permute.xlu0 %595
      %vm597 = vcmp.eq.s32.totalorder %v596, 1
      %v598 = vsel %vm597, %v589, %v523
      %s599 = scalar_lea.vmem [#allocation4], 56
      %v600 = vld [vmem:[%s599] sm:$0xff]
      %602 = vrot.lane.b32.xlu0 %v598, 96
      %v603 = vpop.permute.xlu0 %602
      %v604 = vsel %vm75, %v603, 0
      %606 = vmatpush.msra.mxu0 0.0
      %607 = vmatpush.msra.mxu0 0.0
      %608 = vmatpush.msra.mxu0 0.0
      %609 = vmatpush.msra.mxu0 0.0
      %610 = vmatpush.msra.mxu0 0.0
      %611 = vmatpush.msra.mxu0 0.0
      %612 = vmatpush.msra.mxu0 0.0
      %613 = vmatpush.msra.mxu0 0.0
      %614 = vmatpush.msra.mxu0 0.0
      %615 = vmatpush.msra.mxu0 0.0
      %616 = vmatpush.msra.mxu0 0.0
      %617 = vmatpush.msra.mxu0 0.0
      %618 = vmatpush.msra.mxu0 %v71
      %619 = vmatpush.msra.mxu0 %v70
      %620 = vmatpush.msra.mxu0 %v69
      %621 = vmatpush.msra.mxu0 %v68
      %622 = vmatmul.f32.gmra.mxu0 %v604
      %v623 = vpop.f32.mrf.mxu0
      %v624 = vadd.f32 %v73, %v623
      %625 = vdwg.mxu0
      %v626 = vadd.f32 %v600, %v624
      %v627 = vxor.u32 %v626, 2147483648
      %v628 = vmul.f32 %v627, 1.442695
      %v629 = vpow.pop %v628
      %v630 = vadd.f32 %v629, 1.0
      %v631 = vrcp.pop %v630
      %v632 = vmul.f32 %v630, %v631
      %v633 = vsub.f32 1.0, %v632
      %v634 = vmul.f32 %v631, %v633
      %v635 = vadd.f32 %v631, %v634
      %vm636 = vweird.f32 %v630
      %vm637 = vweird.f32 %v631
      %vm638 = vmor %vm636, %vm637
      %v639 = vsel %vm638, %v631, %v635
      %v640 = vand.u32 2147483647, %v630
      %vm641 = vcmp.eq.f32.partialorder %v640, 8.507059e+37
      %v642 = vand.u32 %v630, 2147483648
      %v643 = vor.u32 1.1754944e-38, %v642
      %v644 = vsel %vm641, %v643, %v639
      %v645 = vmul.f32 1.0, %v644
      %647 = vrot.lane.b32.xlu0 %v624, 64
      %v648 = vpop.permute.xlu0 %647
      %v650 = vmul.f32 %v645, %v648
      %652 = vrot.lane.b32.xlu0 %v650, 64
      %v653 = vpop.permute.xlu0 %652
      %v655 = vadd.f32 %v600, %v653
      %v656 = vtanh.pop %v655
      %v657 = vsub.f32 1.0, %v645
      %659 = vrot.lane.b32.xlu0 %v656, 96
      %v660 = vpop.permute.xlu0 %659
      %v662 = vmul.f32 %v657, %v660
      %v663 = vmul.f32 %v645, %v598
      %v664 = vadd.f32 %v662, %v663
      %s665 = sadd.s32 %s59, 7
      %v666 = vstv %s665
      %vm667 = vcmp.lt.s32.totalorder %v666, %v64
      %v668 = vsel %vm667, 1, 0
      %669 = vset.pattern.permute.xlu0 0
      %670 = vperm.xlu0 %669, %v668
      %v671 = vpop.permute.xlu0 %670
      %vm672 = vcmp.eq.s32.totalorder %v671, 1
      %v673 = vsel %vm672, %v664, %v598
      %675 = vrot.lane.b32.xlu0 %v673, 96
      %v676 = vpop.permute.xlu0 %675
      %678 = vst.msk [vmem:[#allocation9] sm:$0xff] %vm75, %v676
    $region33: #{tpu_custom_call.1} parent=1 // pred_fallthru
      _
    // Predicated region
    $region34: #{tpu_custom_call.1} parent=1 // pred_check
      _
    $region35: #{tpu_custom_call.1} parent=1 // pred_check_branch
      %680 = sbr.rel (0) target = $region37
    $region36: #{tpu_custom_call.1} parent=1 // pred_region
      %682 = vsyncadd [#allocation6], 0
      %s684 = sshll.u32 [#allocation9], 4
      %s685 = int_to_ptr.vmem [resolvable:$true] %s684
      %s686 = sshll.u32 %s5, 4
      %s687 = int_to_ptr.hbm [resolvable:$true] %s686
      %689 = dma.vmem_to_hbm [thread:$0]  %s685, 128, %s687, [#allocation6]
    $region37: #{tpu_custom_call.1} parent=1 // pred_fallthru
      _
    // Predicated region
    $region38: #{tpu_custom_call.1} parent=1 // pred_check
      _
    $region39: #{tpu_custom_call.1} parent=1 // pred_check_branch
      %691 = sbr.rel (0) target = $region41
    $region40: #{tpu_custom_call.1} parent=1 // pred_region
      %693 = dma.done [#allocation6], 128
    $region41: #{tpu_custom_call.1} parent=1 // pred_fallthru
      _
    %694 = vsyncpa [#allocation5], 1
    %695 = vsyncpa [#allocation8], 1
    %696 = vsyncpa [#allocation6], 1

</llo_original>
